<compile_context>
chip_gen: v5e
topology: v5e:2x2
jax: 0.10.0
libtpu: 0.0.40
codegen_flags: <defaults>
</compile_context>

<pallas_src>
import functools
import math

import jax
import jax.numpy as jnp
from jax.experimental import pallas as pl
from jax.experimental.pallas import tpu as pltpu


def _label_smoothing_kernel(x_ref, tgt_ref, out_ref, *, V, v_tile, num_v,
                            padding_idx, confidence, smooth_val, c_const):
    k = pl.program_id(1)                                 # vocab (reduction) step

    x = x_ref[...].astype(jnp.float32)                   # (tn, tv) upcast per-vreg
    tgt = tgt_ref[...]                                    # (tn, 1) i32
    tn, tv = x.shape

    col = jax.lax.broadcasted_iota(jnp.int32, (tn, tv), 1)
    if num_v > 1:
        col = col + k * tv                                # global column index

    if V % v_tile != 0:
        # Ragged last vocab tile: out-of-range columns hold undefined data
        # (possibly NaN) -> zero x there so they cannot pollute the row sum.
        x = jnp.where(col < V, x, 0.0)

    # Smoothed weights: confidence on the target column, smooth_val elsewhere.
    w = jnp.where(col == tgt, jnp.float32(confidence), jnp.float32(smooth_val))
    partial = jnp.sum(w * x, axis=1, keepdims=True)       # (tn, 1) f32

    # Correct the padding column: its true weight is 0 but we charged smooth_val.
    pad_off = padding_idx % v_tile
    x_pad = x[:, pad_off:pad_off + 1]                     # static lane slice (tn,1)

    if num_v == 1:
        partial = partial - jnp.float32(smooth_val) * x_pad
        out_ref[...] = jnp.where(tgt != padding_idx,
                                 jnp.float32(c_const) - partial,
                                 jnp.float32(0.0))
    else:
        pad_tile = padding_idx // v_tile                  # static
        corr = jnp.where(k == pad_tile,
                         jnp.float32(smooth_val) * x_pad, jnp.float32(0.0))
        partial = partial - corr

        @pl.when(k == 0)
        def _init():
            out_ref[...] = jnp.zeros_like(out_ref)

        out_ref[...] += partial                           # accumulate over vocab

        @pl.when(k == num_v - 1)
        def _finalize():
            acc = out_ref[...]
            out_ref[...] = jnp.where(tgt != padding_idx,
                                     jnp.float32(c_const) - acc,
                                     jnp.float32(0.0))


def label_smoothing_loss(x, target, *, size, padding_idx, smoothing,
                         row_tile=None, v_tile=None):
    """x: [N, V] log-probs (f32 or bf16), target: [N] int class ids. Scalar f32 loss."""
    N, V = x.shape
    assert V == size
    assert size > 2, "smoothing/(size-2) requires size > 2"

    tgt2d = target.astype(jnp.int32).reshape(N, 1)        # tiny; x is untouched
    itemsize = jnp.dtype(x.dtype).itemsize
    sublane = max(8, 32 // itemsize)                      # 8 for f32, 16 for bf16

    # ---- vocab tile: full V when small, otherwise a multiple of 128 ----
    V_TILE_MAX = 8192
    if v_tile is None:
        v_tile = V if V <= V_TILE_MAX else V_TILE_MAX
    assert v_tile == V or v_tile % 128 == 0
    num_v = pl.cdiv(V, v_tile)

    # ---- row tile: ~8 MiB of x per buffer, >=2 row steps when N allows ----
    if row_tile is None:
        budget = 8 * 1024 * 1024
        rt = max(sublane, (budget // (v_tile * itemsize)) // sublane * sublane)
        half = -(-N // 2)                                  # cdiv(N, 2)
        rt_cap = max(sublane, -(-half // sublane) * sublane)
        row_tile = min(rt, rt_cap)
    assert row_tile % sublane == 0
    num_rows = pl.cdiv(N, row_tile)

    # ---- compile-time constants ----
    confidence = 1.0 - smoothing
    smooth_val = smoothing / (size - 2)
    c_const = 0.0
    if confidence > 0.0:
        c_const += confidence * math.log(confidence)
    if smooth_val > 0.0:
        c_const += (size - 2) * smooth_val * math.log(smooth_val)

    kernel = functools.partial(
        _label_smoothing_kernel,
        V=V, v_tile=v_tile, num_v=num_v,
        padding_idx=padding_idx, confidence=confidence,
        smooth_val=smooth_val, c_const=c_const,
    )

    # ---- VMEM accounting (lane-padded narrow buffers included) ----
    x_buf = row_tile * v_tile * itemsize                  # per x buffer
    narrow_buf = row_tile * 128 * 4                       # (row_tile,1) pads to 128 lanes
    vmem_needed = 2 * x_buf + 4 * narrow_buf + (2 << 20)  # double-buffered + margin
    try:
        vmem_cap = int(pltpu.get_tpu_info().vmem_capacity_bytes)
    except Exception:
        vmem_cap = 64 * 1024 * 1024
    vmem_limit = int(min(max(vmem_needed, 16 << 20),
                         max(vmem_cap - (8 << 20), 16 << 20)))

    cost = pl.CostEstimate(
        flops=5 * N * V,
        transcendentals=0,
        bytes_accessed=N * V * itemsize + N * 4 + N * 4,
    )

    partials = pl.pallas_call(
        kernel,
        out_shape=jax.ShapeDtypeStruct((N, 1), jnp.float32),
        grid_spec=pltpu.PrefetchScalarGridSpec(
            num_scalar_prefetch=0,
            grid=(num_rows, num_v),                        # reduction (vocab) axis last
            in_specs=[
                pl.BlockSpec((row_tile, v_tile), lambda i, k: (i, k)),
                pl.BlockSpec((row_tile, 1), lambda i, k: (i, 0)),
            ],
            out_specs=pl.BlockSpec((row_tile, 1), lambda i, k: (i, 0)),
        ),
        compiler_params=pltpu.CompilerParams(
            dimension_semantics=("parallel", "arbitrary"),
            vmem_limit_bytes=vmem_limit,
        ),
        cost_estimate=cost,
    )(x, tgt2d)

    return jnp.sum(partials)


def _reference_loss(x, target, *, size, padding_idx, smoothing):
    x = x.astype(jnp.float32)
    N, V = x.shape
    smooth_val = smoothing / (size - 2)
    confidence = 1.0 - smoothing
    col = jnp.arange(V)[None, :]
    t = jnp.where(col == target[:, None], confidence, smooth_val)
    t = jnp.where(col == padding_idx, 0.0, t)
    t = jnp.where(target[:, None] == padding_idx, 0.0, t)
    contrib = jnp.where(t > 0, t * (jnp.log(jnp.maximum(t, 1e-30)) - x), 0.0)
    return jnp.sum(contrib)


if __name__ == "__main__":
    PADDING_IDX = 0
    SMOOTHING = 0.1

    key = jax.random.PRNGKey(0)
    kx, kt = jax.random.split(key)

    def run_case(n, v, dtype, v_tile=None, rtol=1e-5, atol=1e-5):
        logits = jax.random.normal(kx, (n, v), dtype=jnp.float32)
        x = jax.nn.log_softmax(logits, axis=-1).astype(dtype)   # log-probs
        target = jax.random.randint(kt, (n,), 0, v, dtype=jnp.int32)
        target = target.at[3].set(PADDING_IDX)                  # padded tokens
        target = target.at[n - 2].set(PADDING_IDX)
        loss = label_smoothing_loss(x, target, size=v, padding_idx=PADDING_IDX,
                                    smoothing=SMOOTHING, v_tile=v_tile)
        loss = jax.block_until_ready(loss)
        ref = _reference_loss(x, target, size=v, padding_idx=PADDING_IDX,
                              smoothing=SMOOTHING)
        assert jnp.allclose(loss, ref, rtol=rtol, atol=atol), (n, v, dtype, loss, ref)

    # Case 1: f32, N multiple of the sublane tile (2 row grid steps -> megacore).
    run_case(16, 128, jnp.float32)
    # Case 2: ragged N (in-kernel masked tail rows; no wrapper-side jnp.pad of x).
    run_case(13, 128, jnp.float32)
    # Case 3: native bf16 log-probs (half the HBM bytes; f32 accumulation in-kernel).
    run_case(16, 128, jnp.bfloat16, rtol=1e-3, atol=1e-3)
    # Case 4: multiple vocab tiles (vocab reduction axis + accumulator finalize).
    run_case(16, 256, jnp.float32, v_tile=128)
    # Case 5: ragged vocab tail (V % v_tile != 0 -> in-kernel column mask).
    run_case(16, 392, jnp.float32, v_tile=128)

    print("KERNEL_OK")
</pallas_src>

<mosaic_0001>
module attributes {stable_mosaic.version = 11 : i64} {
  func.func @_label_smoothing_kernel(%arg0: i32, %arg1: i32, %arg2: memref<8x128xf32, #tpu.memory_space<vmem>>, %arg3: memref<8x1xi32, #tpu.memory_space<vmem>>, %arg4: memref<8x1xf32, #tpu.memory_space<vmem>>) attributes {dimension_semantics = [#tpu.dimension_semantics<parallel>, #tpu.dimension_semantics<arbitrary>], iteration_bounds = array<i64: 2, 1>, scalar_prefetch = 0 : i64, scratch_operands = 0 : i64, tpu.core_type = #tpu.core_type<tc>, window_params = [{transform_indices = @transform_0, window_bounds = array<i64: 8, 128>}, {transform_indices = @transform_1, window_bounds = array<i64: 8, 1>}, {transform_indices = @transform_2, window_bounds = array<i64: 8, 1>}]} {
    %c0 = arith.constant 0 : index
    %c0_0 = arith.constant 0 : index
    %0 = vector.load %arg2[%c0, %c0_0] : memref<8x128xf32, #tpu.memory_space<vmem>>, vector<8x128xf32>
    %c0_1 = arith.constant 0 : index
    %c0_2 = arith.constant 0 : index
    %1 = vector.load %arg3[%c0_1, %c0_2] : memref<8x1xi32, #tpu.memory_space<vmem>>, vector<8x1xi32>
    %2 = tpu.iota {dimensions = array<i32: 1>} : vector<8x128xi32>
    %3 = vector.broadcast %1 : vector<8x1xi32> to vector<8x128xi32>
    %4 = arith.cmpi eq, %2, %3 : vector<8x128xi32>
    %cst = arith.constant 0.899999976 : f32
    %cst_3 = arith.constant 7.93650805E-4 : f32
    %5 = vector.broadcast %cst : f32 to vector<8x128xf32>
    %6 = vector.broadcast %cst_3 : f32 to vector<8x128xf32>
    %7 = arith.select %4, %5, %6 : vector<8x128xi1>, vector<8x128xf32>
    %8 = arith.mulf %7, %0 : vector<8x128xf32>
    %cst_4 = arith.constant dense<0.000000e+00> : vector<8xf32>
    %9 = vector.multi_reduction <add>, %8, %cst_4 [1] : vector<8x128xf32> to vector<8xf32>
    %10 = vector.shape_cast %9 : vector<8xf32> to vector<8x1xf32>
    %11 = vector.extract_strided_slice %0 {offsets = [0, 0], sizes = [8, 1], strides = [1, 1]} : vector<8x128xf32> to vector<8x1xf32>
    %cst_5 = arith.constant 7.93650805E-4 : f32
    %12 = vector.broadcast %cst_5 : f32 to vector<8x1xf32>
    %13 = arith.mulf %12, %11 : vector<8x1xf32>
    %14 = arith.subf %10, %13 : vector<8x1xf32>
    %c0_i32 = arith.constant 0 : i32
    %15 = vector.broadcast %c0_i32 : i32 to vector<8x1xi32>
    %16 = arith.cmpi ne, %1, %15 : vector<8x1xi32>
    %cst_6 = arith.constant -0.808711171 : f32
    %17 = vector.broadcast %cst_6 : f32 to vector<8x1xf32>
    %18 = arith.subf %17, %14 : vector<8x1xf32>
    %cst_7 = arith.constant 0.000000e+00 : f32
    %19 = vector.broadcast %cst_7 : f32 to vector<8x1xf32>
    %20 = arith.select %16, %18, %19 : vector<8x1xi1>, vector<8x1xf32>
    %c0_8 = arith.constant 0 : index
    %c0_9 = arith.constant 0 : index
    %21 = vector.load %arg4[%c0_8, %c0_9] : memref<8x1xf32, #tpu.memory_space<vmem>>, vector<8x1xf32>
    tpu.vector_store %arg4[%c0_8, %c0_9], %20 {strides = array<i32>} : memref<8x1xf32, #tpu.memory_space<vmem>>, vector<8x1xf32>,
    return
  }
  func.func @transform_0(%arg0: i32, %arg1: i32) -> (i32, i32) {
    %c0_i32 = arith.constant 0 : i32
    return %arg0, %arg1 : i32, i32
  }
  func.func @transform_1(%arg0: i32, %arg1: i32) -> (i32, i32) {
    %c0_i32 = arith.constant 0 : i32
    %c0_i32_0 = arith.constant 0 : i32
    return %arg0, %c0_i32 : i32, i32
  }
  func.func @transform_2(%arg0: i32, %arg1: i32) -> (i32, i32) {
    %c0_i32 = arith.constant 0 : i32
    %c0_i32_0 = arith.constant 0 : i32
    return %arg0, %c0_i32 : i32, i32
  }
}

</mosaic_0001>

<llo_original>
// kernel: tpu_custom_call.1
$region0: #{tpu_custom_call.1}
  #allocation0 [shape = 'u32[]', space=smem, size = 0x4, offset = 0x4, fixed_abs, tag = 'smem constant byte address 0x4 - core index']
  #allocation1 [shape = 'u32[72,128]{1,0:T(1,128)}', space=vmem, size = 0x9000, scoped, tag = 'internal scratch']
  %s0 = inlined_call_operand.vmem [shape: f32[16,128], index: 0, kind: input, shape index: {}]
  %s1 = inlined_call_operand.vmem [shape: s32[16,1], index: 1, kind: input, shape index: {}]
  %s2 = inlined_call_operand.vmem [shape: f32[16,1], index: 2, kind: output, shape index: {}]
  %s3 = sld [smem:[#allocation0]]
  $region41: #{tpu_custom_call.1} parent=0
    _
  %s5 = ssub.s32 1, %s3
  %s6 = scalar_select 0, %s5, %s3
  loop: start=0, step=1, limit=4
  $region2: #{tpu_custom_call.1} parent=0 // loop_pre_header
    _
  $region3: #{tpu_custom_call.1} parent=0 // loop_header
    %s8 = sphi 0, %s12
    %p9 = scmp.ge.s32.totalorder %s8, 4
    %s15 = sphi 0, %s27
    %s16 = sphi 0, %s23
    %s17 = sphi 0, %s15
    %s18 = sphi 0, %s16
    %s19 = sphi 0, %s17
    %s20 = sphi 0, %s18
    %s32 = sphi 0, %s34
    %s35 = sphi 0, %s32
    %s36 = sphi 0, %s35
    %s52 = sphi 0, %s36
    %s58 = sphi 0, %s60
    %s61 = sphi 0, %s58
    %s62 = sphi 0, %s61
    %s78 = sphi 0, %s62
    %s84 = sphi 0, %s86
    %s87 = sphi 0, %s84
    %s88 = sphi 0, %s87
    %s104 = sphi 0, %s88
  $region4: #{tpu_custom_call.1} parent=0 // loop_header_branch
    %11 = sbr.rel (%p9) target = $region8
  $region5: #{tpu_custom_call.1} parent=0 // loop_body
    %s13 = ssub.s32 %s8, 1
    %s14 = ssub.s32 %s8, 2
    %s21 = sadd.s32 1, %s16
    %p22 = scmp.ge.s32.totalorder %s21, 1
    %s23 = scalar_select %p22, 0, %s21
    %s24 = sadd.s32 1, %s15
    %s25 = scalar_select %p22, %s24, %s15
    %p26 = scmp.ge.s32.totalorder %s25, 2
    %s27 = scalar_select %p26, 0, %s25
    %s28 = ssub.s32 %s15, %s27
    %s29 = ssub.s32 %s16, %s23
    %s30 = sor.u32 %s28, %s29
    %p31 = scmp.eq.s32.totalorder %s30, 0
    %s33 = sadd.s32 %s32, 1
    %s34 = scalar_select %p31, %s32, %s33
    %p37 = pneg %p31
    %p38 = scmp.eq.s32.totalorder %s8, 1
    %p39 = por %p37, %p38
    %p40 = scmp.ne.s32.totalorder %s32, %s35
    %p41 = scmp.eq.s32.totalorder %s8, 0
    %p42 = por %p40, %p41
    %p43 = scmp.ne.s32.totalorder %s32, %s35
    %p44 = scmp.eq.s32.totalorder %s13, 1
    %p45 = por %p43, %p44
    %p46 = scmp.ne.s32.totalorder %s35, %s36
    %p47 = scmp.eq.s32.totalorder %s13, 0
    %p48 = por %p46, %p47
    %p49 = scmp.ne.s32.totalorder %s35, %s36
    %p50 = scmp.eq.s32.totalorder %s14, 1
    %p51 = por %p49, %p50
    %p53 = scmp.ne.s32.totalorder %s36, %s52
    %p54 = scmp.eq.s32.totalorder %s14, 0
    %p55 = por %p53, %p54
    %s56 = ssub.s32 %s15, %s27
    %p57 = scmp.eq.s32.totalorder %s56, 0
    %s59 = sadd.s32 %s58, 1
    %s60 = scalar_select %p57, %s58, %s59
    %p63 = pneg %p57
    %p64 = scmp.eq.s32.totalorder %s8, 1
    %p65 = por %p63, %p64
    %p66 = scmp.ne.s32.totalorder %s58, %s61
    %p67 = scmp.eq.s32.totalorder %s8, 0
    %p68 = por %p66, %p67
    %p69 = scmp.ne.s32.totalorder %s58, %s61
    %p70 = scmp.eq.s32.totalorder %s13, 1
    %p71 = por %p69, %p70
    %p72 = scmp.ne.s32.totalorder %s61, %s62
    %p73 = scmp.eq.s32.totalorder %s13, 0
    %p74 = por %p72, %p73
    %p75 = scmp.ne.s32.totalorder %s61, %s62
    %p76 = scmp.eq.s32.totalorder %s14, 1
    %p77 = por %p75, %p76
    %p79 = scmp.ne.s32.totalorder %s62, %s78
    %p80 = scmp.eq.s32.totalorder %s14, 0
    %p81 = por %p79, %p80
    %s82 = ssub.s32 %s15, %s27
    %p83 = scmp.eq.s32.totalorder %s82, 0
    %s85 = sadd.s32 %s84, 1
    %s86 = scalar_select %p83, %s84, %s85
    %p89 = pneg %p83
    %p90 = scmp.eq.s32.totalorder %s8, 1
    %p91 = por %p89, %p90
    %p92 = scmp.ne.s32.totalorder %s84, %s87
    %p93 = scmp.eq.s32.totalorder %s8, 0
    %p94 = por %p92, %p93
    %p95 = scmp.ne.s32.totalorder %s84, %s87
    %p96 = scmp.eq.s32.totalorder %s13, 1
    %p97 = por %p95, %p96
    %p98 = scmp.ne.s32.totalorder %s87, %s88
    %p99 = scmp.eq.s32.totalorder %s13, 0
    %p100 = por %p98, %p99
    %p101 = scmp.ne.s32.totalorder %s87, %s88
    %p102 = scmp.eq.s32.totalorder %s14, 1
    %p103 = por %p101, %p102
    %p105 = scmp.ne.s32.totalorder %s88, %s104
    %p106 = scmp.eq.s32.totalorder %s14, 0
    %p107 = por %p105, %p106
    %p108 = scmp.le.s32.totalorder 1, %s8
    %p109 = scmp.lt.s32.totalorder %s8, 3
    %p110 = pnand %p108, %p109
    %p111 = pneg %p110
    // Predicated region
    $region9: #{tpu_custom_call.1} parent=5 // pred_check
      _
    $region10: #{tpu_custom_call.1} parent=5 // pred_check_branch
      %113 = sbr.rel (%p110) target = $region12
    $region11: #{tpu_custom_call.1} parent=5 // pred_region
      %s114 = ssub.s32 %s8, 1
    $region12: #{tpu_custom_call.1} parent=5 // pred_fallthru
      _
    %p115 = scmp.lt.s32.totalorder %s8, 2
    // Predicated region
    $region13: #{tpu_custom_call.1} parent=5 // pred_check
      %p116 = pneg %p115
    $region14: #{tpu_custom_call.1} parent=5 // pred_check_branch
      %118 = sbr.rel (%p116) target = $region16
    $region15: #{tpu_custom_call.1} parent=5 // pred_region
      // Predicated region
      $region17: #{tpu_custom_call.1} parent=15 // pred_check
        %p119 = pneg %p42
      $region18: #{tpu_custom_call.1} parent=15 // pred_check_branch
        %121 = sbr.rel (%p119) target = $region20
      $region19: #{tpu_custom_call.1} parent=15 // pred_region
        %p122 = scmp.lt.s32.totalorder %s15, 1
        %s123 = scalar_select %p122, %s15, 1
        %p124 = scmp.lt.s32.totalorder %s16, 0
        %s125 = scalar_select %p124, %s16, 0
        %s126 = sadd.s32 %s125, %s123
        %s127 = smul.addr %s126, 8
        %s128 = scalar_lea.vmem %s0, %s127
      $region20: #{tpu_custom_call.1} parent=15 // pred_fallthru
        _
      // Predicated region
      $region21: #{tpu_custom_call.1} parent=15 // pred_check
        %p129 = pneg %p68
      $region22: #{tpu_custom_call.1} parent=15 // pred_check_branch
        %131 = sbr.rel (%p129) target = $region24
      $region23: #{tpu_custom_call.1} parent=15 // pred_region
        %p132 = scmp.lt.s32.totalorder %s15, 1
        %s133 = scalar_select %p132, %s15, 1
        %s134 = smul.addr %s133, 8
        %s135 = scalar_lea.vmem %s1, %s134
      $region24: #{tpu_custom_call.1} parent=15 // pred_fallthru
        _
    $region16: #{tpu_custom_call.1} parent=5 // pred_fallthru
      _
    %p136 = scmp.le.s32.totalorder 1, %s8
    %p137 = scmp.lt.s32.totalorder %s8, 3
    %p138 = pnand %p136, %p137
    %p139 = pneg %p138
    // Predicated region
    $region25: #{tpu_custom_call.1} parent=5 // pred_check
      _
    $region26: #{tpu_custom_call.1} parent=5 // pred_check_branch
      %141 = sbr.rel (%p138) target = $region28
    $region27: #{tpu_custom_call.1} parent=5 // pred_region
      %s142 = ssub.s32 %s8, 1
      %p143 = scmp.lt.s32.totalorder %s17, 1
      %s144 = scalar_select %p143, %s17, 1
      %p145 = scmp.lt.s32.totalorder %s18, 0
      %s146 = scalar_select %p145, %s18, 0
      %s147 = sadd.s32 %s146, %s144
      %s148 = smul.addr %s147, 8
      %s149 = scalar_lea.vmem %s0, %s148
      %p150 = pneg %p48
      %p151 = pneg %p45
      %p152 = scmp.lt.s32.totalorder %s17, 1
      %s153 = scalar_select %p152, %s17, 1
      %s154 = smul.addr %s153, 8
      %s155 = scalar_lea.vmem %s1, %s154
      %p156 = pneg %p74
      %p157 = pneg %p71
      %p158 = pneg %p100
      %p159 = pneg %p97
      %p160 = scmp.lt.s32.totalorder %s17, 1
      %s161 = scalar_select %p160, %s17, 1
      %s162 = smul.addr %s161, 8
      %s163 = scalar_lea.vmem %s2, %s162
      %p164 = scmp.lt.s32.totalorder %s17, 1
      %s165 = scalar_select %p164, %s17, 1
      %p166 = scmp.lt.s32.totalorder %s18, 0
      %s167 = scalar_select %p166, %s18, 0
      %s168 = sadd.s32 %s167, %s165
      %s169 = smul.addr %s168, 8
      %s170 = scalar_lea.vmem %s0, %s169
      %p171 = scmp.lt.s32.totalorder %s17, 1
      %s172 = scalar_select %p171, %s17, 1
      %s173 = smul.addr %s172, 8
      %s174 = scalar_lea.vmem %s1, %s173
      %p175 = scmp.lt.s32.totalorder %s17, 1
      %s176 = scalar_select %p175, %s17, 1
      %s177 = smul.addr %s176, 8
      %s178 = scalar_lea.vmem %s2, %s177
      %v179 = vld [vmem:[%s170] sm:$0xff]
      %v180 = vld [vmem:[%s174] sm:$0xff]
      %v181 = vlaneseq
      %v182 = vand.u32 %v181, 127
      %183 = vset.pattern.permute.xlu0 0
      %184 = vperm.xlu0 %183, %v180
      %v185 = vpop.permute.xlu0 %184
      %vm186 = vcmp.eq.s32.totalorder %v182, %v185
      %v187 = vsel %vm186, 0.9, 0.0007936508
      %v188 = vmul.f32 %v187, %v179
      %189 = vadd.xlane.f32.xlu0 %v188
      %v190 = vpop.xlane.xlu0 %189
      %v191 = vmul.f32 %v179, 0.0007936508
      %v192 = vsub.f32 %v190, %v191
      %vm193 = vcmp.ne.s32.totalorder %v180, 0
      %v194 = vsub.f32 -0.8087112, %v192
      %v195 = vsel %vm193, %v194, 0.0
      %vm196 = vcmask 7168
      %197 = vst.msk [vmem:[%s178] sm:$0xff] %vm196, %v195
      %p198 = scmp.lt.s32.totalorder %s17, 1
      %s199 = scalar_select %p198, %s17, 1
      %s200 = smul.addr %s199, 8
      %s201 = scalar_lea.vmem %s2, %s200
      // Predicated region
      $region29: #{tpu_custom_call.1} parent=27 // pred_check
        %p202 = pneg %p97
      $region30: #{tpu_custom_call.1} parent=27 // pred_check_branch
        %204 = sbr.rel (%p202) target = $region32
      $region31: #{tpu_custom_call.1} parent=27 // pred_region
        _
      $region32: #{tpu_custom_call.1} parent=27 // pred_fallthru
        _
    $region28: #{tpu_custom_call.1} parent=5 // pred_fallthru
      _
    %p205 = scmp.le.s32.totalorder 2, %s8
    // Predicated region
    $region33: #{tpu_custom_call.1} parent=5 // pred_check
      %p206 = pneg %p205
    $region34: #{tpu_custom_call.1} parent=5 // pred_check_branch
      %208 = sbr.rel (%p206) target = $region36
    $region35: #{tpu_custom_call.1} parent=5 // pred_region
      %s209 = ssub.s32 %s8, 2
      // Predicated region
      $region37: #{tpu_custom_call.1} parent=35 // pred_check
        %p210 = pneg %p103
      $region38: #{tpu_custom_call.1} parent=35 // pred_check_branch
        %212 = sbr.rel (%p210) target = $region40
      $region39: #{tpu_custom_call.1} parent=35 // pred_region
        %p213 = scmp.lt.s32.totalorder %s19, 1
        %s214 = scalar_select %p213, %s19, 1
        %s215 = smul.addr %s214, 8
        %s216 = scalar_lea.vmem %s2, %s215
      $region40: #{tpu_custom_call.1} parent=35 // pred_fallthru
        _
    $region36: #{tpu_custom_call.1} parent=5 // pred_fallthru
      _
  $region6: #{tpu_custom_call.1} parent=0 // loop_footer
    %s12 = sadd.s32 1, %s8
  $region7: #{tpu_custom_call.1} parent=0 // loop_footer_branch
    %7 = sbr.rel target = $region3
  $region8: #{tpu_custom_call.1} parent=0 // loop_exit
    _

</llo_original>
